<compile_context>
chip_gen: v5e
topology: v5e:2x2
jax: 0.10.0
libtpu: 0.0.40
codegen_flags: <defaults>
</compile_context>

<pallas_src>
import functools
import math

import jax
import jax.numpy as jnp
from jax.experimental import pallas as pl
from jax.experimental.pallas import tpu as pltpu

FOLD = 16  # batch rows folded into the 128-lane dimension


def _round_up(x, m):
    return ((x + m - 1) // m) * m


def _cdiv(a, b):
    return (a + b - 1) // b


def _block_diag(w, n):
    """Block-diagonal matrix with n copies of w on the diagonal."""
    k, m = w.shape
    eye = jnp.eye(n, dtype=w.dtype)
    return (eye[:, None, :, None] * w[None, :, None, :]).reshape(n * k, n * m)


def _qnet_kernel(x_ref, w1_ref, b1_ref, w2_ref, b2_ref, o_ref):
    # x: (tbf, FOLD*In) f32 -> bf16 in-kernel (cast co-issues on the VPU;
    # avoids a separate XLA pass over x in HBM).
    x = x_ref[...].astype(jnp.bfloat16)
    # hidden = relu(x @ W1b + b1) : bf16 MXU matmul, f32 accumulate,
    # f32 bias / ReLU epilogue on the VPU.
    h = jnp.dot(x, w1_ref[...], preferred_element_type=jnp.float32)
    h = jnp.maximum(h + b1_ref[...], 0.0)
    # out = hidden @ W2b + b2 : kept in f32 (M-stream bound, essentially free)
    # to avoid a second bf16 truncation.
    o = jnp.dot(h, w2_ref[...], preferred_element_type=jnp.float32)
    o_ref[...] = (o + b2_ref[...]).astype(o_ref.dtype)   # (tbf, 128) lane-dense


@functools.partial(jax.jit, static_argnames=("block_b",))
def linear_qnet_forward(x, w1, b1, w2, b2, *, block_b=8192):
    """Fused forward pass of Linear_QNet: relu(x @ w1 + b1) @ w2 + b2.

    x  : (B, In)  float32
    w1 : (In, H)  float32  (transpose of torch's (H, In))
    b1 : (1, H)   float32
    w2 : (H, O)   float32  (transpose of torch's (O, H))
    b2 : (1, O)   float32
    returns (B, O) float32
    """
    B, In = x.shape
    H = w1.shape[1]
    O = w2.shape[1]

    # ---- fold FOLD batch rows into the lane dimension ----------------------
    b_pad = _round_up(B, FOLD)
    if b_pad != B:                      # only pad up to the fold factor
        x = jnp.pad(x, ((0, b_pad - B), (0, 0)))
    Bf = b_pad // FOLD
    x_f = x.reshape(Bf, FOLD * In)      # row-major reshape: free at HBM

    # Block-diagonal weights / tiled biases (tiny; VMEM-resident in-kernel).
    w1_b = _block_diag(w1.astype(jnp.bfloat16), FOLD)   # (FOLD*In, FOLD*H) bf16
    w2_b = _block_diag(w2.astype(jnp.float32), FOLD)    # (FOLD*H, FOLD*O) f32
    b1_t = jnp.tile(b1.astype(jnp.float32), (1, FOLD))  # (1, FOLD*H)
    b2_t = jnp.tile(b2.astype(jnp.float32), (1, FOLD))  # (1, FOLD*O)

    # ---- batch tiling over folded rows --------------------------------------
    block_bf = max(8, block_b // FOLD)
    tbf = _round_up(min(block_bf, _round_up(Bf, 8)), 8)
    nb = _cdiv(Bf, tbf)
    # v7x: ensure >= 2 grid steps for large batches so the "parallel" batch
    # axis shards across both TensorCores (no measurable cost on v5e/v6e).
    if nb == 1 and Bf >= 16:
        tbf = _round_up(_cdiv(Bf, 2), 8)
        nb = _cdiv(Bf, tbf)

    cost = pl.CostEstimate(
        flops=2 * Bf * ((FOLD * In) * (FOLD * H) + (FOLD * H) * (FOLD * O)),
        transcendentals=0,
        bytes_accessed=(4 * b_pad * In                    # f32 x stream
                        + 4 * b_pad * O                   # f32 output stream
                        + 2 * (FOLD * In) * (FOLD * H)    # bf16 W1b (resident)
                        + 4 * (FOLD * H) * (FOLD * O)     # f32  W2b (resident)
                        + 4 * FOLD * (H + O)),            # f32 biases
    )

    out_f = pl.pallas_call(
        _qnet_kernel,
        out_shape=jax.ShapeDtypeStruct((Bf, FOLD * O), jnp.float32),
        grid_spec=pltpu.PrefetchScalarGridSpec(
            num_scalar_prefetch=0,
            grid=(nb,),
            in_specs=[
                pl.BlockSpec((tbf, FOLD * In), lambda i: (i, 0)),      # x streamed
                pl.BlockSpec((FOLD * In, FOLD * H), lambda i: (0, 0)),  # W1b resident
                pl.BlockSpec((1, FOLD * H), lambda i: (0, 0)),          # b1 resident
                pl.BlockSpec((FOLD * H, FOLD * O), lambda i: (0, 0)),   # W2b resident
                pl.BlockSpec((1, FOLD * O), lambda i: (0, 0)),          # b2 resident
            ],
            out_specs=pl.BlockSpec((tbf, FOLD * O), lambda i: (i, 0)),  # lane-dense
        ),
        compiler_params=pltpu.CompilerParams(
            dimension_semantics=("parallel",),   # megacore sharding of batch tiles
        ),
        cost_estimate=cost,
    )(x_f, w1_b, b1_t, w2_b, b2_t)

    # Unfold: (Bf, FOLD*O) -> (b_pad, O) (free reshape), drop padded rows.
    out = out_f.reshape(b_pad, O)
    return out[:B] if b_pad != B else out


def init_params(key, input_size, hidden_size, output_size):
    """PyTorch-style init: U(-1/sqrt(fan_in), 1/sqrt(fan_in))."""
    k1, k2, k3, k4 = jax.random.split(key, 4)
    bound1 = 1.0 / math.sqrt(input_size)
    bound2 = 1.0 / math.sqrt(hidden_size)
    w1 = jax.random.uniform(k1, (input_size, hidden_size), jnp.float32, -bound1, bound1)
    b1 = jax.random.uniform(k2, (1, hidden_size), jnp.float32, -bound1, bound1)
    w2 = jax.random.uniform(k3, (hidden_size, output_size), jnp.float32, -bound2, bound2)
    b2 = jax.random.uniform(k4, (1, output_size), jnp.float32, -bound2, bound2)
    return w1, b1, w2, b2


# TODO(synk): Linear_QNet.save (torch checkpoint I/O) is host-side and has no
# Pallas equivalent; only the forward pass is implemented here.

if __name__ == "__main__":
    # Small shapes consistent with the module; batch=200 with block_b=128
    # exercises the fold padding (200 -> 208), a 2-step batch grid, and a
    # ragged last block (13 folded rows over tiles of 8).
    batch, input_size, hidden_size, output_size = 200, 16, 32, 8

    key = jax.random.PRNGKey(0)
    kx, kp = jax.random.split(key)
    x = jax.random.normal(kx, (batch, input_size), jnp.float32)
    w1, b1, w2, b2 = init_params(kp, input_size, hidden_size, output_size)

    out = linear_qnet_forward(x, w1, b1, w2, b2, block_b=128)
    out = jax.block_until_ready(out)

    # Pure-JAX f32 reference; relaxed tolerance since the first matmul's
    # operands are bf16 on the MXU.
    ref = jnp.maximum(x @ w1 + b1, 0.0) @ w2 + b2
    assert out.shape == (batch, output_size)
    assert jnp.allclose(out, ref, atol=2e-2, rtol=2e-2), (
        float(jnp.max(jnp.abs(out - ref))))

    print("KERNEL_OK")
</pallas_src>

<mosaic_0001>
module attributes {stable_mosaic.version = 11 : i64} {
  func.func @_qnet_kernel(%arg0: i32, %arg1: memref<8x256xf32, #tpu.memory_space<vmem>>, %arg2: memref<256x512xbf16, #tpu.memory_space<vmem>>, %arg3: memref<1x512xf32, #tpu.memory_space<vmem>>, %arg4: memref<512x128xf32, #tpu.memory_space<vmem>>, %arg5: memref<1x128xf32, #tpu.memory_space<vmem>>, %arg6: memref<8x128xf32, #tpu.memory_space<vmem>>) attributes {dimension_semantics = [#tpu.dimension_semantics<parallel>], iteration_bounds = array<i64: 2>, scalar_prefetch = 0 : i64, scratch_operands = 0 : i64, tpu.core_type = #tpu.core_type<tc>, window_params = [{transform_indices = @transform_0, window_bounds = array<i64: 8, 256>}, {pipeline_mode = #tpu.pipeline_mode<synchronous>, transform_indices = @transform_1, window_bounds = array<i64: 256, 512>}, {pipeline_mode = #tpu.pipeline_mode<synchronous>, transform_indices = @transform_2, window_bounds = array<i64: 1, 512>}, {pipeline_mode = #tpu.pipeline_mode<synchronous>, transform_indices = @transform_3, window_bounds = array<i64: 512, 128>}, {pipeline_mode = #tpu.pipeline_mode<synchronous>, transform_indices = @transform_4, window_bounds = array<i64: 1, 128>}, {transform_indices = @transform_5, window_bounds = array<i64: 8, 128>}]} {
    %c0 = arith.constant 0 : index
    %c0_0 = arith.constant 0 : index
    %0 = vector.load %arg1[%c0, %c0_0] : memref<8x256xf32, #tpu.memory_space<vmem>>, vector<8x256xf32>
    %1 = arith.truncf %0 : vector<8x256xf32> to vector<8x256xbf16>
    %c0_1 = arith.constant 0 : index
    %c0_2 = arith.constant 0 : index
    %2 = vector.load %arg2[%c0_1, %c0_2] : memref<256x512xbf16, #tpu.memory_space<vmem>>, vector<256x512xbf16>
    %cst = arith.constant dense<0.000000e+00> : vector<8x512xf32>
    %3 = tpu.matmul %1, %2, %cst {dimension_numbers = #tpu.dot_dimension_numbers<[1], [0], [0], [1], [0, 0, 1, 1], [], []>} : vector<8x256xbf16>, vector<256x512xbf16>, vector<8x512xf32> -> vector<8x512xf32>
    %c0_3 = arith.constant 0 : index
    %c0_4 = arith.constant 0 : index
    %4 = vector.load %arg3[%c0_3, %c0_4] : memref<1x512xf32, #tpu.memory_space<vmem>>, vector<1x512xf32>
    %5 = vector.broadcast %4 : vector<1x512xf32> to vector<8x512xf32>
    %6 = arith.addf %3, %5 : vector<8x512xf32>
    %cst_5 = arith.constant 0.000000e+00 : f32
    %7 = vector.broadcast %cst_5 : f32 to vector<8x512xf32>
    %8 = arith.maximumf %6, %7 : vector<8x512xf32>
    %c0_6 = arith.constant 0 : index
    %c0_7 = arith.constant 0 : index
    %9 = vector.load %arg4[%c0_6, %c0_7] : memref<512x128xf32, #tpu.memory_space<vmem>>, vector<512x128xf32>
    %cst_8 = arith.constant dense<0.000000e+00> : vector<8x128xf32>
    %10 = tpu.matmul %8, %9, %cst_8 {dimension_numbers = #tpu.dot_dimension_numbers<[1], [0], [0], [1], [0, 0, 1, 1], [], []>} : vector<8x512xf32>, vector<512x128xf32>, vector<8x128xf32> -> vector<8x128xf32>
    %c0_9 = arith.constant 0 : index
    %c0_10 = arith.constant 0 : index
    %11 = vector.load %arg5[%c0_9, %c0_10] : memref<1x128xf32, #tpu.memory_space<vmem>>, vector<1x128xf32>
    %12 = vector.broadcast %11 : vector<1x128xf32> to vector<8x128xf32>
    %13 = arith.addf %10, %12 : vector<8x128xf32>
    %c0_11 = arith.constant 0 : index
    %c0_12 = arith.constant 0 : index
    %14 = vector.load %arg6[%c0_11, %c0_12] : memref<8x128xf32, #tpu.memory_space<vmem>>, vector<8x128xf32>
    tpu.vector_store %arg6[%c0_11, %c0_12], %13 {strides = array<i32>} : memref<8x128xf32, #tpu.memory_space<vmem>>, vector<8x128xf32>,
    return
  }
  func.func @transform_0(%arg0: i32) -> (i32, i32) {
    %c0_i32 = arith.constant 0 : i32
    %c0_i32_0 = arith.constant 0 : i32
    return %arg0, %c0_i32 : i32, i32
  }
  func.func @transform_1(%arg0: i32) -> (i32, i32) {
    %c0_i32 = arith.constant 0 : i32
    %c0_i32_0 = arith.constant 0 : i32
    %c0_i32_1 = arith.constant 0 : i32
    return %c0_i32, %c0_i32_0 : i32, i32
  }
  func.func @transform_2(%arg0: i32) -> (i32, i32) {
    %c0_i32 = arith.constant 0 : i32
    %c0_i32_0 = arith.constant 0 : i32
    %c0_i32_1 = arith.constant 0 : i32
    return %c0_i32, %c0_i32_0 : i32, i32
  }
  func.func @transform_3(%arg0: i32) -> (i32, i32) {
    %c0_i32 = arith.constant 0 : i32
    %c0_i32_0 = arith.constant 0 : i32
    %c0_i32_1 = arith.constant 0 : i32
    return %c0_i32, %c0_i32_0 : i32, i32
  }
  func.func @transform_4(%arg0: i32) -> (i32, i32) {
    %c0_i32 = arith.constant 0 : i32
    %c0_i32_0 = arith.constant 0 : i32
    %c0_i32_1 = arith.constant 0 : i32
    return %c0_i32, %c0_i32_0 : i32, i32
  }
  func.func @transform_5(%arg0: i32) -> (i32, i32) {
    %c0_i32 = arith.constant 0 : i32
    %c0_i32_0 = arith.constant 0 : i32
    return %arg0, %c0_i32 : i32, i32
  }
}

</mosaic_0001>

<llo_original>
// kernel: linear_qnet_forward.1
$region0: #{linear_qnet_forward.1}
  #allocation0 [shape = 'u32[]', space=smem, size = 0x4, offset = 0x4, fixed_abs, tag = 'smem constant byte address 0x4 - core index']
  #allocation1 [shape = 'u32[72,128]{1,0:T(1,128)}', space=vmem, size = 0x9000, scoped, tag = 'internal scratch']
  %s0 = inlined_call_operand.vmem [shape: f32[13,256], index: 0, kind: input, shape index: {}]
  %s1 = inlined_call_operand.vmem [shape: bf16[256,512], index: 1, kind: input, shape index: {}]
  %s2 = inlined_call_operand.vmem [shape: f32[1,512], index: 2, kind: input, shape index: {}]
  %s3 = inlined_call_operand.vmem [shape: f32[512,128], index: 3, kind: input, shape index: {}]
  %s4 = inlined_call_operand.vmem [shape: f32[1,128], index: 4, kind: input, shape index: {}]
  %s5 = inlined_call_operand.vmem [shape: f32[13,128], index: 5, kind: output, shape index: {}]
  %s6 = sld [smem:[#allocation0]]
  $region53: #{linear_qnet_forward.1} parent=0
    _
  %s8 = ssub.s32 1, %s6
  %s9 = scalar_select 0, %s8, %s6
  loop: start=0, step=1, limit=4
  $region2: #{linear_qnet_forward.1} parent=0 // loop_pre_header
    _
  $region3: #{linear_qnet_forward.1} parent=0 // loop_header
    %s11 = sphi 0, %s15
    %p12 = scmp.ge.s32.totalorder %s11, 4
    %s21 = sphi 0, %s23
    %s24 = sphi 0, %s21
    %s25 = sphi 0, %s24
    %s41 = sphi 0, %s25
    %s45 = sphi 0, %s45
    %s47 = sphi 0, %s45
    %s48 = sphi 0, %s47
    %s62 = sphi 0, %s48
    %s66 = sphi 0, %s66
    %s68 = sphi 0, %s66
    %s69 = sphi 0, %s68
    %s83 = sphi 0, %s69
    %s87 = sphi 0, %s87
    %s89 = sphi 0, %s87
    %s90 = sphi 0, %s89
    %s104 = sphi 0, %s90
    %s108 = sphi 0, %s108
    %s110 = sphi 0, %s108
    %s111 = sphi 0, %s110
    %s125 = sphi 0, %s111
    %s131 = sphi 0, %s133
    %s134 = sphi 0, %s131
    %s135 = sphi 0, %s134
    %s151 = sphi 0, %s135
  $region4: #{linear_qnet_forward.1} parent=0 // loop_header_branch
    %14 = sbr.rel (%p12) target = $region8
  $region5: #{linear_qnet_forward.1} parent=0 // loop_body
    %s16 = ssub.s32 %s11, 1
    %s17 = ssub.s32 %s11, 2
    %s18 = sadd.s32 %s11, 1
    %s19 = ssub.s32 %s11, %s18
    %p20 = scmp.eq.s32.totalorder %s19, 0
    %s22 = sadd.s32 %s21, 1
    %s23 = scalar_select %p20, %s21, %s22
    %p26 = pneg %p20
    %p27 = scmp.eq.s32.totalorder %s11, 1
    %p28 = por %p26, %p27
    %p29 = scmp.ne.s32.totalorder %s21, %s24
    %p30 = scmp.eq.s32.totalorder %s11, 0
    %p31 = por %p29, %p30
    %p32 = scmp.ne.s32.totalorder %s21, %s24
    %p33 = scmp.eq.s32.totalorder %s16, 1
    %p34 = por %p32, %p33
    %p35 = scmp.ne.s32.totalorder %s24, %s25
    %p36 = scmp.eq.s32.totalorder %s16, 0
    %p37 = por %p35, %p36
    %p38 = scmp.ne.s32.totalorder %s24, %s25
    %p39 = scmp.eq.s32.totalorder %s17, 1
    %p40 = por %p38, %p39
    %p42 = scmp.ne.s32.totalorder %s25, %s41
    %p43 = scmp.eq.s32.totalorder %s17, 0
    %p44 = por %p42, %p43
    %s46 = sadd.s32 %s45, 1
    %p49 = scmp.eq.s32.totalorder %s11, 1
    %p50 = scmp.ne.s32.totalorder %s45, %s47
    %p51 = scmp.eq.s32.totalorder %s11, 0
    %p52 = por %p50, %p51
    %p53 = scmp.ne.s32.totalorder %s45, %s47
    %p54 = scmp.eq.s32.totalorder %s16, 1
    %p55 = por %p53, %p54
    %p56 = scmp.ne.s32.totalorder %s47, %s48
    %p57 = scmp.eq.s32.totalorder %s16, 0
    %p58 = por %p56, %p57
    %p59 = scmp.ne.s32.totalorder %s47, %s48
    %p60 = scmp.eq.s32.totalorder %s17, 1
    %p61 = por %p59, %p60
    %p63 = scmp.ne.s32.totalorder %s48, %s62
    %p64 = scmp.eq.s32.totalorder %s17, 0
    %p65 = por %p63, %p64
    %s67 = sadd.s32 %s66, 1
    %p70 = scmp.eq.s32.totalorder %s11, 1
    %p71 = scmp.ne.s32.totalorder %s66, %s68
    %p72 = scmp.eq.s32.totalorder %s11, 0
    %p73 = por %p71, %p72
    %p74 = scmp.ne.s32.totalorder %s66, %s68
    %p75 = scmp.eq.s32.totalorder %s16, 1
    %p76 = por %p74, %p75
    %p77 = scmp.ne.s32.totalorder %s68, %s69
    %p78 = scmp.eq.s32.totalorder %s16, 0
    %p79 = por %p77, %p78
    %p80 = scmp.ne.s32.totalorder %s68, %s69
    %p81 = scmp.eq.s32.totalorder %s17, 1
    %p82 = por %p80, %p81
    %p84 = scmp.ne.s32.totalorder %s69, %s83
    %p85 = scmp.eq.s32.totalorder %s17, 0
    %p86 = por %p84, %p85
    %s88 = sadd.s32 %s87, 1
    %p91 = scmp.eq.s32.totalorder %s11, 1
    %p92 = scmp.ne.s32.totalorder %s87, %s89
    %p93 = scmp.eq.s32.totalorder %s11, 0
    %p94 = por %p92, %p93
    %p95 = scmp.ne.s32.totalorder %s87, %s89
    %p96 = scmp.eq.s32.totalorder %s16, 1
    %p97 = por %p95, %p96
    %p98 = scmp.ne.s32.totalorder %s89, %s90
    %p99 = scmp.eq.s32.totalorder %s16, 0
    %p100 = por %p98, %p99
    %p101 = scmp.ne.s32.totalorder %s89, %s90
    %p102 = scmp.eq.s32.totalorder %s17, 1
    %p103 = por %p101, %p102
    %p105 = scmp.ne.s32.totalorder %s90, %s104
    %p106 = scmp.eq.s32.totalorder %s17, 0
    %p107 = por %p105, %p106
    %s109 = sadd.s32 %s108, 1
    %p112 = scmp.eq.s32.totalorder %s11, 1
    %p113 = scmp.ne.s32.totalorder %s108, %s110
    %p114 = scmp.eq.s32.totalorder %s11, 0
    %p115 = por %p113, %p114
    %p116 = scmp.ne.s32.totalorder %s108, %s110
    %p117 = scmp.eq.s32.totalorder %s16, 1
    %p118 = por %p116, %p117
    %p119 = scmp.ne.s32.totalorder %s110, %s111
    %p120 = scmp.eq.s32.totalorder %s16, 0
    %p121 = por %p119, %p120
    %p122 = scmp.ne.s32.totalorder %s110, %s111
    %p123 = scmp.eq.s32.totalorder %s17, 1
    %p124 = por %p122, %p123
    %p126 = scmp.ne.s32.totalorder %s111, %s125
    %p127 = scmp.eq.s32.totalorder %s17, 0
    %p128 = por %p126, %p127
    %s129 = ssub.s32 %s11, %s18
    %p130 = scmp.eq.s32.totalorder %s129, 0
    %s132 = sadd.s32 %s131, 1
    %s133 = scalar_select %p130, %s131, %s132
    %p136 = pneg %p130
    %p137 = scmp.eq.s32.totalorder %s11, 1
    %p138 = por %p136, %p137
    %p139 = scmp.ne.s32.totalorder %s131, %s134
    %p140 = scmp.eq.s32.totalorder %s11, 0
    %p141 = por %p139, %p140
    %p142 = scmp.ne.s32.totalorder %s131, %s134
    %p143 = scmp.eq.s32.totalorder %s16, 1
    %p144 = por %p142, %p143
    %p145 = scmp.ne.s32.totalorder %s134, %s135
    %p146 = scmp.eq.s32.totalorder %s16, 0
    %p147 = por %p145, %p146
    %p148 = scmp.ne.s32.totalorder %s134, %s135
    %p149 = scmp.eq.s32.totalorder %s17, 1
    %p150 = por %p148, %p149
    %p152 = scmp.ne.s32.totalorder %s135, %s151
    %p153 = scmp.eq.s32.totalorder %s17, 0
    %p154 = por %p152, %p153
    %p155 = scmp.le.s32.totalorder 1, %s11
    %p156 = scmp.lt.s32.totalorder %s11, 3
    %p157 = pnand %p155, %p156
    %p158 = pneg %p157
    // Predicated region
    $region9: #{linear_qnet_forward.1} parent=5 // pred_check
      _
    $region10: #{linear_qnet_forward.1} parent=5 // pred_check_branch
      %160 = sbr.rel (%p157) target = $region12
    $region11: #{linear_qnet_forward.1} parent=5 // pred_region
      %s161 = ssub.s32 %s11, 1
      // Predicated region
      $region13: #{linear_qnet_forward.1} parent=11 // pred_check
        %p162 = pneg %p58
      $region14: #{linear_qnet_forward.1} parent=11 // pred_check_branch
        %164 = sbr.rel (%p162) target = $region16
      $region15: #{linear_qnet_forward.1} parent=11 // pred_region
        _
      $region16: #{linear_qnet_forward.1} parent=11 // pred_fallthru
        _
      // Predicated region
      $region17: #{linear_qnet_forward.1} parent=11 // pred_check
        %p165 = pneg %p79
      $region18: #{linear_qnet_forward.1} parent=11 // pred_check_branch
        %167 = sbr.rel (%p165) target = $region20
      $region19: #{linear_qnet_forward.1} parent=11 // pred_region
        _
      $region20: #{linear_qnet_forward.1} parent=11 // pred_fallthru
        _
      // Predicated region
      $region21: #{linear_qnet_forward.1} parent=11 // pred_check
        %p168 = pneg %p100
      $region22: #{linear_qnet_forward.1} parent=11 // pred_check_branch
        %170 = sbr.rel (%p168) target = $region24
      $region23: #{linear_qnet_forward.1} parent=11 // pred_region
        _
      $region24: #{linear_qnet_forward.1} parent=11 // pred_fallthru
        _
      // Predicated region
      $region25: #{linear_qnet_forward.1} parent=11 // pred_check
        %p171 = pneg %p121
      $region26: #{linear_qnet_forward.1} parent=11 // pred_check_branch
        %173 = sbr.rel (%p171) target = $region28
      $region27: #{linear_qnet_forward.1} parent=11 // pred_region
        _
      $region28: #{linear_qnet_forward.1} parent=11 // pred_fallthru
        _
    $region12: #{linear_qnet_forward.1} parent=5 // pred_fallthru
      _
    %p174 = scmp.lt.s32.totalorder %s11, 2
    // Predicated region
    $region29: #{linear_qnet_forward.1} parent=5 // pred_check
      %p175 = pneg %p174
    $region30: #{linear_qnet_forward.1} parent=5 // pred_check_branch
      %177 = sbr.rel (%p175) target = $region32
    $region31: #{linear_qnet_forward.1} parent=5 // pred_region
      // Predicated region
      $region33: #{linear_qnet_forward.1} parent=31 // pred_check
        %p178 = pneg %p31
      $region34: #{linear_qnet_forward.1} parent=31 // pred_check_branch
        %180 = sbr.rel (%p178) target = $region36
      $region35: #{linear_qnet_forward.1} parent=31 // pred_region
        %p181 = scmp.lt.s32.totalorder %s11, 1
        %s182 = scalar_select %p181, %s11, 1
        %s183 = smul.addr %s182, 2
        %s184 = smul.addr %s183, 8
        %s185 = scalar_lea.vmem %s0, %s184
      $region36: #{linear_qnet_forward.1} parent=31 // pred_fallthru
        _
    $region32: #{linear_qnet_forward.1} parent=5 // pred_fallthru
      _
    %p186 = scmp.le.s32.totalorder 1, %s11
    %p187 = scmp.lt.s32.totalorder %s11, 3
    %p188 = pnand %p186, %p187
    %p189 = pneg %p188
    // Predicated region
    $region37: #{linear_qnet_forward.1} parent=5 // pred_check
      _
    $region38: #{linear_qnet_forward.1} parent=5 // pred_check_branch
      %191 = sbr.rel (%p188) target = $region40
    $region39: #{linear_qnet_forward.1} parent=5 // pred_region
      %s192 = ssub.s32 %s11, 1
      %p193 = scmp.lt.s32.totalorder %s16, 1
      %s194 = scalar_select %p193, %s16, 1
      %s195 = smul.addr %s194, 2
      %s196 = smul.addr %s195, 8
      %s197 = scalar_lea.vmem %s0, %s196
      %p198 = pneg %p37
      %p199 = pneg %p34
      %p200 = pneg %p58
      %p201 = pneg %p55
      %p202 = pneg %p79
      %p203 = pneg %p76
      %p204 = pneg %p100
      %p205 = pneg %p97
      %p206 = pneg %p121
      %p207 = pneg %p118
      %p208 = pneg %p147
      %p209 = pneg %p144
      %p210 = scmp.lt.s32.totalorder %s16, 1
      %s211 = scalar_select %p210, %s16, 1
      %s212 = smul.addr %s211, 8
      %s213 = scalar_lea.vmem %s5, %s212
      %p214 = scmp.lt.s32.totalorder %s16, 1
      %s215 = scalar_select %p214, %s16, 1
      %s216 = smul.addr %s215, 2
      %s217 = smul.addr %s216, 8
      %s218 = scalar_lea.vmem %s0, %s217
      %p219 = scmp.lt.s32.totalorder %s16, 1
      %s220 = scalar_select %p219, %s16, 1
      %s221 = smul.addr %s220, 8
      %s222 = scalar_lea.vmem %s5, %s221
      %v223 = vld [vmem:[%s218] sm:$0xff]
      %v224 = vld [vmem:[%s218 + $0x8] sm:$0xff]
      %v225 = vpack.c.bf16 %v223, %v223
      %v226 = vpack.c.bf16 %v224, %v224
      %v227 = vld [vmem:[%s1] sm:$0xff]
      %v228 = vld [vmem:[%s1 + $0x8] sm:$0xff]
      %v229 = vld [vmem:[%s1 + $0x10] sm:$0xff]
      %v230 = vld [vmem:[%s1 + $0x18] sm:$0xff]
      %v231 = vld [vmem:[%s1 + $0x20] sm:$0xff]
      %v232 = vld [vmem:[%s1 + $0x28] sm:$0xff]
      %v233 = vld [vmem:[%s1 + $0x30] sm:$0xff]
      %v234 = vld [vmem:[%s1 + $0x38] sm:$0xff]
      %v235 = vld [vmem:[%s1 + $0x40] sm:$0xff]
      %v236 = vld [vmem:[%s1 + $0x48] sm:$0xff]
      %v237 = vld [vmem:[%s1 + $0x50] sm:$0xff]
      %v238 = vld [vmem:[%s1 + $0x58] sm:$0xff]
      %v239 = vld [vmem:[%s1 + $0x60] sm:$0xff]
      %v240 = vld [vmem:[%s1 + $0x68] sm:$0xff]
      %v241 = vld [vmem:[%s1 + $0x70] sm:$0xff]
      %v242 = vld [vmem:[%s1 + $0x78] sm:$0xff]
      %v243 = vld [vmem:[%s1 + $0x80] sm:$0xff]
      %v244 = vld [vmem:[%s1 + $0x88] sm:$0xff]
      %v245 = vld [vmem:[%s1 + $0x90] sm:$0xff]
      %v246 = vld [vmem:[%s1 + $0x98] sm:$0xff]
      %v247 = vld [vmem:[%s1 + $0xa0] sm:$0xff]
      %v248 = vld [vmem:[%s1 + $0xa8] sm:$0xff]
      %v249 = vld [vmem:[%s1 + $0xb0] sm:$0xff]
      %v250 = vld [vmem:[%s1 + $0xb8] sm:$0xff]
      %v251 = vld [vmem:[%s1 + $0xc0] sm:$0xff]
      %v252 = vld [vmem:[%s1 + $0xc8] sm:$0xff]
      %v253 = vld [vmem:[%s1 + $0xd0] sm:$0xff]
      %v254 = vld [vmem:[%s1 + $0xd8] sm:$0xff]
      %v255 = vld [vmem:[%s1 + $0xe0] sm:$0xff]
      %v256 = vld [vmem:[%s1 + $0xe8] sm:$0xff]
      %v257 = vld [vmem:[%s1 + $0xf0] sm:$0xff]
      %v258 = vld [vmem:[%s1 + $0xf8] sm:$0xff]
      %v259 = vld [vmem:[%s1 + $0x100] sm:$0xff]
      %v260 = vld [vmem:[%s1 + $0x108] sm:$0xff]
      %v261 = vld [vmem:[%s1 + $0x110] sm:$0xff]
      %v262 = vld [vmem:[%s1 + $0x118] sm:$0xff]
      %v263 = vld [vmem:[%s1 + $0x120] sm:$0xff]
      %v264 = vld [vmem:[%s1 + $0x128] sm:$0xff]
      %v265 = vld [vmem:[%s1 + $0x130] sm:$0xff]
      %v266 = vld [vmem:[%s1 + $0x138] sm:$0xff]
      %v267 = vld [vmem:[%s1 + $0x140] sm:$0xff]
      %v268 = vld [vmem:[%s1 + $0x148] sm:$0xff]
      %v269 = vld [vmem:[%s1 + $0x150] sm:$0xff]
      %v270 = vld [vmem:[%s1 + $0x158] sm:$0xff]
      %v271 = vld [vmem:[%s1 + $0x160] sm:$0xff]
      %v272 = vld [vmem:[%s1 + $0x168] sm:$0xff]
      %v273 = vld [vmem:[%s1 + $0x170] sm:$0xff]
      %v274 = vld [vmem:[%s1 + $0x178] sm:$0xff]
      %v275 = vld [vmem:[%s1 + $0x180] sm:$0xff]
      %v276 = vld [vmem:[%s1 + $0x188] sm:$0xff]
      %v277 = vld [vmem:[%s1 + $0x190] sm:$0xff]
      %v278 = vld [vmem:[%s1 + $0x198] sm:$0xff]
      %v279 = vld [vmem:[%s1 + $0x1a0] sm:$0xff]
      %v280 = vld [vmem:[%s1 + $0x1a8] sm:$0xff]
      %v281 = vld [vmem:[%s1 + $0x1b0] sm:$0xff]
      %v282 = vld [vmem:[%s1 + $0x1b8] sm:$0xff]
      %v283 = vld [vmem:[%s1 + $0x1c0] sm:$0xff]
      %v284 = vld [vmem:[%s1 + $0x1c8] sm:$0xff]
      %v285 = vld [vmem:[%s1 + $0x1d0] sm:$0xff]
      %v286 = vld [vmem:[%s1 + $0x1d8] sm:$0xff]
      %v287 = vld [vmem:[%s1 + $0x1e0] sm:$0xff]
      %v288 = vld [vmem:[%s1 + $0x1e8] sm:$0xff]
      %v289 = vld [vmem:[%s1 + $0x1f0] sm:$0xff]
      %v290 = vld [vmem:[%s1 + $0x1f8] sm:$0xff]
      %v291 = vld [vmem:[%s2] sm:$0xf]
      %v293 = vperm.slane %v291, 0
      %v294 = vperm.slane %v291, 1
      %v295 = vperm.slane %v291, 2
      %v296 = vperm.slane %v291, 3
      %v365 = vunpack.c.l.b16 %v227
      %v366 = vunpack.c.h.b16 %v227
      %v367 = vunpack.c.l.b16 %v228
      %v368 = vunpack.c.h.b16 %v228
      %v369 = vunpack.c.l.b16 %v229
      %v370 = vunpack.c.h.b16 %v229
      %v371 = vunpack.c.l.b16 %v230
      %v372 = vunpack.c.h.b16 %v230
      %v373 = vunpack.c.l.b16 %v231
      %v374 = vunpack.c.h.b16 %v231
      %v375 = vunpack.c.l.b16 %v232
      %v376 = vunpack.c.h.b16 %v232
      %v377 = vunpack.c.l.b16 %v233
      %v378 = vunpack.c.h.b16 %v233
      %v379 = vunpack.c.l.b16 %v234
      %v380 = vunpack.c.h.b16 %v234
      %v381 = vunpack.c.l.b16 %v235
      %v382 = vunpack.c.h.b16 %v235
      %v383 = vunpack.c.l.b16 %v236
      %v384 = vunpack.c.h.b16 %v236
      %v385 = vunpack.c.l.b16 %v237
      %v386 = vunpack.c.h.b16 %v237
      %v387 = vunpack.c.l.b16 %v238
      %v388 = vunpack.c.h.b16 %v238
      %v389 = vunpack.c.l.b16 %v239
      %v390 = vunpack.c.h.b16 %v239
      %v391 = vunpack.c.l.b16 %v240
      %v392 = vunpack.c.h.b16 %v240
      %v393 = vunpack.c.l.b16 %v241
      %v394 = vunpack.c.h.b16 %v241
      %v395 = vunpack.c.l.b16 %v242
      %v396 = vunpack.c.h.b16 %v242
      %v397 = vunpack.c.l.b16 %v243
      %v398 = vunpack.c.h.b16 %v243
      %v399 = vunpack.c.l.b16 %v244
      %v400 = vunpack.c.h.b16 %v244
      %v401 = vunpack.c.l.b16 %v245
      %v402 = vunpack.c.h.b16 %v245
      %v403 = vunpack.c.l.b16 %v246
      %v404 = vunpack.c.h.b16 %v246
      %v405 = vunpack.c.l.b16 %v247
      %v406 = vunpack.c.h.b16 %v247
      %v407 = vunpack.c.l.b16 %v248
      %v408 = vunpack.c.h.b16 %v248
      %v409 = vunpack.c.l.b16 %v249
      %v410 = vunpack.c.h.b16 %v249
      %v411 = vunpack.c.l.b16 %v250
      %v412 = vunpack.c.h.b16 %v250
      %v413 = vunpack.c.l.b16 %v251
      %v414 = vunpack.c.h.b16 %v251
      %v415 = vunpack.c.l.b16 %v252
      %v416 = vunpack.c.h.b16 %v252
      %v417 = vunpack.c.l.b16 %v253
      %v418 = vunpack.c.h.b16 %v253
      %v419 = vunpack.c.l.b16 %v254
      %v420 = vunpack.c.h.b16 %v254
      %v421 = vunpack.c.l.b16 %v255
      %v422 = vunpack.c.h.b16 %v255
      %v423 = vunpack.c.l.b16 %v256
      %v424 = vunpack.c.h.b16 %v256
      %v425 = vunpack.c.l.b16 %v257
      %v426 = vunpack.c.h.b16 %v257
      %v427 = vunpack.c.l.b16 %v258
      %v428 = vunpack.c.h.b16 %v258
      %v429 = vunpack.c.l.b16 %v259
      %v430 = vunpack.c.h.b16 %v259
      %v431 = vunpack.c.l.b16 %v260
      %v432 = vunpack.c.h.b16 %v260
      %v433 = vunpack.c.l.b16 %v261
      %v434 = vunpack.c.h.b16 %v261
      %v435 = vunpack.c.l.b16 %v262
      %v436 = vunpack.c.h.b16 %v262
      %v437 = vunpack.c.l.b16 %v263
      %v438 = vunpack.c.h.b16 %v263
      %v439 = vunpack.c.l.b16 %v264
      %v440 = vunpack.c.h.b16 %v264
      %v441 = vunpack.c.l.b16 %v265
      %v442 = vunpack.c.h.b16 %v265
      %v443 = vunpack.c.l.b16 %v266
      %v444 = vunpack.c.h.b16 %v266
      %v445 = vunpack.c.l.b16 %v267
      %v446 = vunpack.c.h.b16 %v267
      %v447 = vunpack.c.l.b16 %v268
      %v448 = vunpack.c.h.b16 %v268
      %v449 = vunpack.c.l.b16 %v269
      %v450 = vunpack.c.h.b16 %v269
      %v451 = vunpack.c.l.b16 %v270
      %v452 = vunpack.c.h.b16 %v270
      %v453 = vunpack.c.l.b16 %v271
      %v454 = vunpack.c.h.b16 %v271
      %v455 = vunpack.c.l.b16 %v272
      %v456 = vunpack.c.h.b16 %v272
      %v457 = vunpack.c.l.b16 %v273
      %v458 = vunpack.c.h.b16 %v273
      %v459 = vunpack.c.l.b16 %v274
      %v460 = vunpack.c.h.b16 %v274
      %v461 = vunpack.c.l.b16 %v275
      %v462 = vunpack.c.h.b16 %v275
      %v463 = vunpack.c.l.b16 %v276
      %v464 = vunpack.c.h.b16 %v276
      %v465 = vunpack.c.l.b16 %v277
      %v466 = vunpack.c.h.b16 %v277
      %v467 = vunpack.c.l.b16 %v278
      %v468 = vunpack.c.h.b16 %v278
      %v469 = vunpack.c.l.b16 %v279
      %v470 = vunpack.c.h.b16 %v279
      %v471 = vunpack.c.l.b16 %v280
      %v472 = vunpack.c.h.b16 %v280
      %v473 = vunpack.c.l.b16 %v281
      %v474 = vunpack.c.h.b16 %v281
      %v475 = vunpack.c.l.b16 %v282
      %v476 = vunpack.c.h.b16 %v282
      %v477 = vunpack.c.l.b16 %v283
      %v478 = vunpack.c.h.b16 %v283
      %v479 = vunpack.c.l.b16 %v284
      %v480 = vunpack.c.h.b16 %v284
      %v481 = vunpack.c.l.b16 %v285
      %v482 = vunpack.c.h.b16 %v285
      %v483 = vunpack.c.l.b16 %v286
      %v484 = vunpack.c.h.b16 %v286
      %v485 = vunpack.c.l.b16 %v287
      %v486 = vunpack.c.h.b16 %v287
      %v487 = vunpack.c.l.b16 %v288
      %v488 = vunpack.c.h.b16 %v288
      %v489 = vunpack.c.l.b16 %v289
      %v490 = vunpack.c.h.b16 %v289
      %v491 = vunpack.c.l.b16 %v290
      %v492 = vunpack.c.h.b16 %v290
      %v493 = vpack.c.b16 %v369, %v365
      %v494 = vpack.c.b16 %v370, %v366
      %v495 = vpack.c.b16 %v371, %v367
      %v496 = vpack.c.b16 %v372, %v368
      %v497 = vpack.c.b16 %v377, %v373
      %v498 = vpack.c.b16 %v378, %v374
      %v499 = vpack.c.b16 %v379, %v375
      %v500 = vpack.c.b16 %v380, %v376
      %v501 = vpack.c.b16 %v385, %v381
      %v502 = vpack.c.b16 %v386, %v382
      %v503 = vpack.c.b16 %v387, %v383
      %v504 = vpack.c.b16 %v388, %v384
      %v505 = vpack.c.b16 %v393, %v389
      %v506 = vpack.c.b16 %v394, %v390
      %v507 = vpack.c.b16 %v395, %v391
      %v508 = vpack.c.b16 %v396, %v392
      %v509 = vpack.c.b16 %v401, %v397
      %v510 = vpack.c.b16 %v402, %v398
      %v511 = vpack.c.b16 %v403, %v399
      %v512 = vpack.c.b16 %v404, %v400
      %v513 = vpack.c.b16 %v409, %v405
      %v514 = vpack.c.b16 %v410, %v406
      %v515 = vpack.c.b16 %v411, %v407
      %v516 = vpack.c.b16 %v412, %v408
      %v517 = vpack.c.b16 %v417, %v413
      %v518 = vpack.c.b16 %v418, %v414
      %v519 = vpack.c.b16 %v419, %v415
      %v520 = vpack.c.b16 %v420, %v416
      %v521 = vpack.c.b16 %v425, %v421
      %v522 = vpack.c.b16 %v426, %v422
      %v523 = vpack.c.b16 %v427, %v423
      %v524 = vpack.c.b16 %v428, %v424
      %v525 = vpack.c.b16 %v433, %v429
      %v526 = vpack.c.b16 %v434, %v430
      %v527 = vpack.c.b16 %v435, %v431
      %v528 = vpack.c.b16 %v436, %v432
      %v529 = vpack.c.b16 %v441, %v437
      %v530 = vpack.c.b16 %v442, %v438
      %v531 = vpack.c.b16 %v443, %v439
      %v532 = vpack.c.b16 %v444, %v440
      %v533 = vpack.c.b16 %v449, %v445
      %v534 = vpack.c.b16 %v450, %v446
      %v535 = vpack.c.b16 %v451, %v447
      %v536 = vpack.c.b16 %v452, %v448
      %v537 = vpack.c.b16 %v457, %v453
      %v538 = vpack.c.b16 %v458, %v454
      %v539 = vpack.c.b16 %v459, %v455
      %v540 = vpack.c.b16 %v460, %v456
      %v541 = vpack.c.b16 %v465, %v461
      %v542 = vpack.c.b16 %v466, %v462
      %v543 = vpack.c.b16 %v467, %v463
      %v544 = vpack.c.b16 %v468, %v464
      %v545 = vpack.c.b16 %v473, %v469
      %v546 = vpack.c.b16 %v474, %v470
      %v547 = vpack.c.b16 %v475, %v471
      %v548 = vpack.c.b16 %v476, %v472
      %v549 = vpack.c.b16 %v481, %v477
      %v550 = vpack.c.b16 %v482, %v478
      %v551 = vpack.c.b16 %v483, %v479
      %v552 = vpack.c.b16 %v484, %v480
      %v553 = vpack.c.b16 %v489, %v485
      %v554 = vpack.c.b16 %v490, %v486
      %v555 = vpack.c.b16 %v491, %v487
      %v556 = vpack.c.b16 %v492, %v488
      %621 = vmatpush.bf16.msra.mxu0 %v521
      %622 = vmatpush.bf16.msra.mxu0 %v517
      %623 = vmatpush.bf16.msra.mxu0 %v513
      %624 = vmatpush.bf16.msra.mxu0 %v509
      %625 = vmatpush.bf16.msra.mxu0 %v505
      %626 = vmatpush.bf16.msra.mxu0 %v501
      %627 = vmatpush.bf16.msra.mxu0 %v497
      %628 = vmatpush.bf16.msra.mxu0 %v493
      %629 = vmatmul.bf16.gmra.mxu0 %v225
      %v630 = vpop.f32.mrf.mxu0
      %v631 = vadd.f32 %v293, %v630
      %v632 = vpop.f32.mrf.mxu0
      %633 = vdwg.mxu0
      %634 = vmatpush.bf16.msra.mxu0 %v553
      %635 = vmatpush.bf16.msra.mxu0 %v549
      %636 = vmatpush.bf16.msra.mxu0 %v545
      %637 = vmatpush.bf16.msra.mxu0 %v541
      %638 = vmatpush.bf16.msra.mxu0 %v537
      %639 = vmatpush.bf16.msra.mxu0 %v533
      %640 = vmatpush.bf16.msra.mxu0 %v529
      %641 = vmatpush.bf16.msra.mxu0 %v525
      %642 = vmatmul.bf16.gmra.mxu0 %v226
      %v643 = vpop.f32.mrf.mxu0
      %v644 = vadd.f32 %v631, %v643
      %v645 = vpop.f32.mrf.mxu0
      %646 = vdwg.mxu0
      %647 = vmatpush.bf16.msra.mxu0 %v522
      %648 = vmatpush.bf16.msra.mxu0 %v518
      %649 = vmatpush.bf16.msra.mxu0 %v514
      %650 = vmatpush.bf16.msra.mxu0 %v510
      %651 = vmatpush.bf16.msra.mxu0 %v506
      %652 = vmatpush.bf16.msra.mxu0 %v502
      %653 = vmatpush.bf16.msra.mxu0 %v498
      %654 = vmatpush.bf16.msra.mxu0 %v494
      %655 = vmatmul.bf16.gmra.mxu0 %v225
      %v656 = vpop.f32.mrf.mxu0
      %v657 = vadd.f32 %v294, %v656
      %v658 = vpop.f32.mrf.mxu0
      %659 = vdwg.mxu0
      %660 = vmatpush.bf16.msra.mxu0 %v554
      %661 = vmatpush.bf16.msra.mxu0 %v550
      %662 = vmatpush.bf16.msra.mxu0 %v546
      %663 = vmatpush.bf16.msra.mxu0 %v542
      %664 = vmatpush.bf16.msra.mxu0 %v538
      %665 = vmatpush.bf16.msra.mxu0 %v534
      %666 = vmatpush.bf16.msra.mxu0 %v530
      %667 = vmatpush.bf16.msra.mxu0 %v526
      %668 = vmatmul.bf16.gmra.mxu0 %v226
      %v669 = vpop.f32.mrf.mxu0
      %v670 = vadd.f32 %v657, %v669
      %v671 = vpop.f32.mrf.mxu0
      %672 = vdwg.mxu0
      %673 = vmatpush.bf16.msra.mxu0 %v523
      %674 = vmatpush.bf16.msra.mxu0 %v519
      %675 = vmatpush.bf16.msra.mxu0 %v515
      %676 = vmatpush.bf16.msra.mxu0 %v511
      %677 = vmatpush.bf16.msra.mxu0 %v507
      %678 = vmatpush.bf16.msra.mxu0 %v503
      %679 = vmatpush.bf16.msra.mxu0 %v499
      %680 = vmatpush.bf16.msra.mxu0 %v495
      %681 = vmatmul.bf16.gmra.mxu0 %v225
      %v682 = vpop.f32.mrf.mxu0
      %v683 = vadd.f32 %v295, %v682
      %v684 = vpop.f32.mrf.mxu0
      %685 = vdwg.mxu0
      %686 = vmatpush.bf16.msra.mxu0 %v555
      %687 = vmatpush.bf16.msra.mxu0 %v551
      %688 = vmatpush.bf16.msra.mxu0 %v547
      %689 = vmatpush.bf16.msra.mxu0 %v543
      %690 = vmatpush.bf16.msra.mxu0 %v539
      %691 = vmatpush.bf16.msra.mxu0 %v535
      %692 = vmatpush.bf16.msra.mxu0 %v531
      %693 = vmatpush.bf16.msra.mxu0 %v527
      %694 = vmatmul.bf16.gmra.mxu0 %v226
      %v695 = vpop.f32.mrf.mxu0
      %v696 = vadd.f32 %v683, %v695
      %v697 = vpop.f32.mrf.mxu0
      %698 = vdwg.mxu0
      %699 = vmatpush.bf16.msra.mxu0 %v524
      %700 = vmatpush.bf16.msra.mxu0 %v520
      %701 = vmatpush.bf16.msra.mxu0 %v516
      %702 = vmatpush.bf16.msra.mxu0 %v512
      %703 = vmatpush.bf16.msra.mxu0 %v508
      %704 = vmatpush.bf16.msra.mxu0 %v504
      %705 = vmatpush.bf16.msra.mxu0 %v500
      %706 = vmatpush.bf16.msra.mxu0 %v496
      %707 = vmatmul.bf16.gmra.mxu0 %v225
      %v708 = vpop.f32.mrf.mxu0
      %v709 = vadd.f32 %v296, %v708
      %v710 = vpop.f32.mrf.mxu0
      %711 = vdwg.mxu0
      %712 = vmatpush.bf16.msra.mxu0 %v556
      %713 = vmatpush.bf16.msra.mxu0 %v552
      %714 = vmatpush.bf16.msra.mxu0 %v548
      %715 = vmatpush.bf16.msra.mxu0 %v544
      %716 = vmatpush.bf16.msra.mxu0 %v540
      %717 = vmatpush.bf16.msra.mxu0 %v536
      %718 = vmatpush.bf16.msra.mxu0 %v532
      %719 = vmatpush.bf16.msra.mxu0 %v528
      %720 = vmatmul.bf16.gmra.mxu0 %v226
      %v721 = vpop.f32.mrf.mxu0
      %v722 = vadd.f32 %v709, %v721
      %v723 = vpop.f32.mrf.mxu0
      %724 = vdwg.mxu0
      %v725 = vmax.f32 %v644, 0.0
      %v726 = vmax.f32 %v670, 0.0
      %v727 = vmax.f32 %v696, 0.0
      %v728 = vmax.f32 %v722, 0.0
      %v729 = vld [vmem:[%s3] sm:$0xff]
      %v730 = vld [vmem:[%s3 + $0x8] sm:$0xff]
      %v731 = vld [vmem:[%s3 + $0x10] sm:$0xff]
      %v732 = vld [vmem:[%s3 + $0x18] sm:$0xff]
      %v733 = vld [vmem:[%s3 + $0x20] sm:$0xff]
      %v734 = vld [vmem:[%s3 + $0x28] sm:$0xff]
      %v735 = vld [vmem:[%s3 + $0x30] sm:$0xff]
      %v736 = vld [vmem:[%s3 + $0x38] sm:$0xff]
      %v737 = vld [vmem:[%s3 + $0x40] sm:$0xff]
      %v738 = vld [vmem:[%s3 + $0x48] sm:$0xff]
      %v739 = vld [vmem:[%s3 + $0x50] sm:$0xff]
      %v740 = vld [vmem:[%s3 + $0x58] sm:$0xff]
      %v741 = vld [vmem:[%s3 + $0x60] sm:$0xff]
      %v742 = vld [vmem:[%s3 + $0x68] sm:$0xff]
      %v743 = vld [vmem:[%s3 + $0x70] sm:$0xff]
      %v744 = vld [vmem:[%s3 + $0x78] sm:$0xff]
      %v745 = vld [vmem:[%s3 + $0x80] sm:$0xff]
      %v746 = vld [vmem:[%s3 + $0x88] sm:$0xff]
      %v747 = vld [vmem:[%s3 + $0x90] sm:$0xff]
      %v748 = vld [vmem:[%s3 + $0x98] sm:$0xff]
      %v749 = vld [vmem:[%s3 + $0xa0] sm:$0xff]
      %v750 = vld [vmem:[%s3 + $0xa8] sm:$0xff]
      %v751 = vld [vmem:[%s3 + $0xb0] sm:$0xff]
      %v752 = vld [vmem:[%s3 + $0xb8] sm:$0xff]
      %v753 = vld [vmem:[%s3 + $0xc0] sm:$0xff]
      %v754 = vld [vmem:[%s3 + $0xc8] sm:$0xff]
      %v755 = vld [vmem:[%s3 + $0xd0] sm:$0xff]
      %v756 = vld [vmem:[%s3 + $0xd8] sm:$0xff]
      %v757 = vld [vmem:[%s3 + $0xe0] sm:$0xff]
      %v758 = vld [vmem:[%s3 + $0xe8] sm:$0xff]
      %v759 = vld [vmem:[%s3 + $0xf0] sm:$0xff]
      %v760 = vld [vmem:[%s3 + $0xf8] sm:$0xff]
      %v761 = vld [vmem:[%s3 + $0x100] sm:$0xff]
      %v762 = vld [vmem:[%s3 + $0x108] sm:$0xff]
      %v763 = vld [vmem:[%s3 + $0x110] sm:$0xff]
      %v764 = vld [vmem:[%s3 + $0x118] sm:$0xff]
      %v765 = vld [vmem:[%s3 + $0x120] sm:$0xff]
      %v766 = vld [vmem:[%s3 + $0x128] sm:$0xff]
      %v767 = vld [vmem:[%s3 + $0x130] sm:$0xff]
      %v768 = vld [vmem:[%s3 + $0x138] sm:$0xff]
      %v769 = vld [vmem:[%s3 + $0x140] sm:$0xff]
      %v770 = vld [vmem:[%s3 + $0x148] sm:$0xff]
      %v771 = vld [vmem:[%s3 + $0x150] sm:$0xff]
      %v772 = vld [vmem:[%s3 + $0x158] sm:$0xff]
      %v773 = vld [vmem:[%s3 + $0x160] sm:$0xff]
      %v774 = vld [vmem:[%s3 + $0x168] sm:$0xff]
      %v775 = vld [vmem:[%s3 + $0x170] sm:$0xff]
      %v776 = vld [vmem:[%s3 + $0x178] sm:$0xff]
      %v777 = vld [vmem:[%s3 + $0x180] sm:$0xff]
      %v778 = vld [vmem:[%s3 + $0x188] sm:$0xff]
      %v779 = vld [vmem:[%s3 + $0x190] sm:$0xff]
      %v780 = vld [vmem:[%s3 + $0x198] sm:$0xff]
      %v781 = vld [vmem:[%s3 + $0x1a0] sm:$0xff]
      %v782 = vld [vmem:[%s3 + $0x1a8] sm:$0xff]
      %v783 = vld [vmem:[%s3 + $0x1b0] sm:$0xff]
      %v784 = vld [vmem:[%s3 + $0x1b8] sm:$0xff]
      %v785 = vld [vmem:[%s3 + $0x1c0] sm:$0xff]
      %v786 = vld [vmem:[%s3 + $0x1c8] sm:$0xff]
      %v787 = vld [vmem:[%s3 + $0x1d0] sm:$0xff]
      %v788 = vld [vmem:[%s3 + $0x1d8] sm:$0xff]
      %v789 = vld [vmem:[%s3 + $0x1e0] sm:$0xff]
      %v790 = vld [vmem:[%s3 + $0x1e8] sm:$0xff]
      %v791 = vld [vmem:[%s3 + $0x1f0] sm:$0xff]
      %v792 = vld [vmem:[%s3 + $0x1f8] sm:$0xff]
      %v793 = vld [vmem:[%s4] sm:$0x1]
      %v795 = vperm.slane %v793, 0
      %797 = vmatpush.msra.mxu0 %v744
      %798 = vmatpush.msra.mxu0 %v743
      %799 = vmatpush.msra.mxu0 %v742
      %800 = vmatpush.msra.mxu0 %v741
      %801 = vmatpush.msra.mxu0 %v740
      %802 = vmatpush.msra.mxu0 %v739
      %803 = vmatpush.msra.mxu0 %v738
      %804 = vmatpush.msra.mxu0 %v737
      %805 = vmatpush.msra.mxu0 %v736
      %806 = vmatpush.msra.mxu0 %v735
      %807 = vmatpush.msra.mxu0 %v734
      %808 = vmatpush.msra.mxu0 %v733
      %809 = vmatpush.msra.mxu0 %v732
      %810 = vmatpush.msra.mxu0 %v731
      %811 = vmatpush.msra.mxu0 %v730
      %812 = vmatpush.msra.mxu0 %v729
      %813 = vmatmul.f32.gmra.mxu0 %v725
      %v814 = vpop.f32.mrf.mxu0
      %v815 = vadd.f32 %v795, %v814
      %816 = vdwg.mxu0
      %817 = vmatpush.msra.mxu0 %v760
      %818 = vmatpush.msra.mxu0 %v759
      %819 = vmatpush.msra.mxu0 %v758
      %820 = vmatpush.msra.mxu0 %v757
      %821 = vmatpush.msra.mxu0 %v756
      %822 = vmatpush.msra.mxu0 %v755
      %823 = vmatpush.msra.mxu0 %v754
      %824 = vmatpush.msra.mxu0 %v753
      %825 = vmatpush.msra.mxu0 %v752
      %826 = vmatpush.msra.mxu0 %v751
      %827 = vmatpush.msra.mxu0 %v750
      %828 = vmatpush.msra.mxu0 %v749
      %829 = vmatpush.msra.mxu0 %v748
      %830 = vmatpush.msra.mxu0 %v747
      %831 = vmatpush.msra.mxu0 %v746
      %832 = vmatpush.msra.mxu0 %v745
      %833 = vmatmul.f32.gmra.mxu0 %v726
      %v834 = vpop.f32.mrf.mxu0
      %v835 = vadd.f32 %v815, %v834
      %836 = vdwg.mxu0
      %837 = vmatpush.msra.mxu0 %v776
      %838 = vmatpush.msra.mxu0 %v775
      %839 = vmatpush.msra.mxu0 %v774
      %840 = vmatpush.msra.mxu0 %v773
      %841 = vmatpush.msra.mxu0 %v772
      %842 = vmatpush.msra.mxu0 %v771
      %843 = vmatpush.msra.mxu0 %v770
      %844 = vmatpush.msra.mxu0 %v769
      %845 = vmatpush.msra.mxu0 %v768
      %846 = vmatpush.msra.mxu0 %v767
      %847 = vmatpush.msra.mxu0 %v766
      %848 = vmatpush.msra.mxu0 %v765
      %849 = vmatpush.msra.mxu0 %v764
      %850 = vmatpush.msra.mxu0 %v763
      %851 = vmatpush.msra.mxu0 %v762
      %852 = vmatpush.msra.mxu0 %v761
      %853 = vmatmul.f32.gmra.mxu0 %v727
      %v854 = vpop.f32.mrf.mxu0
      %v855 = vadd.f32 %v835, %v854
      %856 = vdwg.mxu0
      %857 = vmatpush.msra.mxu0 %v792
      %858 = vmatpush.msra.mxu0 %v791
      %859 = vmatpush.msra.mxu0 %v790
      %860 = vmatpush.msra.mxu0 %v789
      %861 = vmatpush.msra.mxu0 %v788
      %862 = vmatpush.msra.mxu0 %v787
      %863 = vmatpush.msra.mxu0 %v786
      %864 = vmatpush.msra.mxu0 %v785
      %865 = vmatpush.msra.mxu0 %v784
      %866 = vmatpush.msra.mxu0 %v783
      %867 = vmatpush.msra.mxu0 %v782
      %868 = vmatpush.msra.mxu0 %v781
      %869 = vmatpush.msra.mxu0 %v780
      %870 = vmatpush.msra.mxu0 %v779
      %871 = vmatpush.msra.mxu0 %v778
      %872 = vmatpush.msra.mxu0 %v777
      %873 = vmatmul.f32.gmra.mxu0 %v728
      %v874 = vpop.f32.mrf.mxu0
      %v875 = vadd.f32 %v855, %v874
      %876 = vdwg.mxu0
      %877 = vst [vmem:[%s222] sm:$0xff] %v875
      %p878 = scmp.lt.s32.totalorder %s16, 1
      %s879 = scalar_select %p878, %s16, 1
      %s880 = smul.addr %s879, 8
      %s881 = scalar_lea.vmem %s5, %s880
      // Predicated region
      $region41: #{linear_qnet_forward.1} parent=39 // pred_check
        %p882 = pneg %p144
      $region42: #{linear_qnet_forward.1} parent=39 // pred_check_branch
        %884 = sbr.rel (%p882) target = $region44
      $region43: #{linear_qnet_forward.1} parent=39 // pred_region
        _
      $region44: #{linear_qnet_forward.1} parent=39 // pred_fallthru
        _
    $region40: #{linear_qnet_forward.1} parent=5 // pred_fallthru
      _
    %p885 = scmp.le.s32.totalorder 2, %s11
    // Predicated region
    $region45: #{linear_qnet_forward.1} parent=5 // pred_check
      %p886 = pneg %p885
    $region46: #{linear_qnet_forward.1} parent=5 // pred_check_branch
      %888 = sbr.rel (%p886) target = $region48
    $region47: #{linear_qnet_forward.1} parent=5 // pred_region
      %s889 = ssub.s32 %s11, 2
      // Predicated region
      $region49: #{linear_qnet_forward.1} parent=47 // pred_check
        %p890 = pneg %p150
      $region50: #{linear_qnet_forward.1} parent=47 // pred_check_branch
        %892 = sbr.rel (%p890) target = $region52
      $region51: #{linear_qnet_forward.1} parent=47 // pred_region
        %p893 = scmp.lt.s32.totalorder %s17, 1
        %s894 = scalar_select %p893, %s17, 1
        %s895 = smul.addr %s894, 8
        %s896 = scalar_lea.vmem %s5, %s895
      $region52: #{linear_qnet_forward.1} parent=47 // pred_fallthru
        _
    $region48: #{linear_qnet_forward.1} parent=5 // pred_fallthru
      _
  $region6: #{linear_qnet_forward.1} parent=0 // loop_footer
    %s15 = sadd.s32 1, %s11
  $region7: #{linear_qnet_forward.1} parent=0 // loop_footer_branch
    %10 = sbr.rel target = $region3
  $region8: #{linear_qnet_forward.1} parent=0 // loop_exit
    _

</llo_original>
